<compile_context>
chip_gen: v7x
topology: tpu7x:2x2x1
jax: 0.10.0
libtpu: 0.0.40
codegen_flags: <defaults>
</compile_context>

<pallas_src>
import functools

import jax
import jax.numpy as jnp
from jax.experimental import pallas as pl
from jax.experimental.pallas import tpu as pltpu

EPS = 1e-5
EXPANSION = 4
LANE = 128


def _detect_vmem_limit():
    """Generation-aware VMEM budget: ~75% of physical (v5e/v6e 128 MiB -> 96 MiB,
    v7x 64 MiB -> 48 MiB).  Falls back to the conservative v7x figure."""
    try:
        phys = int(pltpu.get_tpu_info().vmem_capacity_bytes)
    except Exception:
        phys = 64 * 1024 * 1024
    return int(min(phys * 3 // 4, 100 * 1024 * 1024))


_VMEM_LIMIT = _detect_vmem_limit()
_TILE_BUDGET = max(8 << 20, _VMEM_LIMIT // 5)      # double-buffered bytes / step

_COMPILER_PARAMS = pltpu.CompilerParams(
    dimension_semantics=("parallel",),
    vmem_limit_bytes=_VMEM_LIMIT,
)


# --------------------------------------------------------------------------- #
# small host-side helpers (pure glue)
# --------------------------------------------------------------------------- #
def _round_up(x, m):
    return (x + m - 1) // m * m


def _pad_last(a, target):
    pad = target - a.shape[-1]
    if pad == 0:
        return a
    widths = [(0, 0)] * (a.ndim - 1) + [(0, pad)]
    return jnp.pad(a, widths)


def _pad2(a, rows, cols):
    return jnp.pad(a, ((0, rows - a.shape[0]), (0, cols - a.shape[1])))


def _pick_tile(m, bytes_per_row, max_rows=1024):
    """Largest row tile (multiple of 16, <= max_rows) whose double-buffered
    per-step footprint stays under the budget.  The grid uses pl.cdiv, so the
    tile need not divide m; partial trailing blocks are masked where stats are
    computed."""
    target = max(8, min(m, max_rows, _TILE_BUDGET // max(1, 2 * bytes_per_row)))
    if m <= target:
        return m                       # single / full-extent blocks are legal
    return max(16, (target // 16) * 16)


def _bn_scale_shift(stats, count, gamma, beta):
    """Fold batch stats + affine params into per-channel scale/shift (f32).
    Single-pass formulation: var = E[x^2] - E[x]^2.  Zero-padded gamma/beta
    give scale == shift == 0 on padded lanes."""
    mean = stats[0] / count
    var = stats[1] / count - mean * mean
    scale = gamma * jax.lax.rsqrt(var + EPS)
    return jnp.stack([scale, beta - mean * scale], axis=0)  # (2, C)


# --------------------------------------------------------------------------- #
# Pass A: per-channel sum / sum-of-squares of a (rows, C) slab
# --------------------------------------------------------------------------- #
def _stats_kernel(x_ref, st_ref, *, m_total, tile, need_mask):
    x = x_ref[...]
    if need_mask:  # cdiv grid: zero rows past m_total in the trailing block
        row = (pl.program_id(0) * tile
               + jax.lax.broadcasted_iota(jnp.int32, (x.shape[0], 1), 0))
        x = jnp.where(row < m_total, x, 0.0)
    c = x.shape[1]
    st_ref[0:1, 0:1, :] = jnp.sum(x, axis=0, keepdims=True).reshape(1, 1, c)
    st_ref[0:1, 1:2, :] = jnp.sum(x * x, axis=0, keepdims=True).reshape(1, 1, c)


# --------------------------------------------------------------------------- #
# Pass B: relu(bn1(x)) -> conv1 (1x1) + fused bn2 partial statistics
# --------------------------------------------------------------------------- #
def _bn1_conv1_kernel(x_ref, s1_ref, w1_ref, out1_ref, st_ref, *,
                      m_total, tile, need_mask):
    pre = jnp.maximum(x_ref[...] * s1_ref[0:1, :] + s1_ref[1:2, :], 0.0)
    o1 = jnp.dot(pre.astype(jnp.bfloat16), w1_ref[...],
                 preferred_element_type=jnp.float32)
    out1_ref[...] = o1.astype(jnp.bfloat16)          # bf16 inter-pass handoff
    if need_mask:
        row = (pl.program_id(0) * tile
               + jax.lax.broadcasted_iota(jnp.int32, (o1.shape[0], 1), 0))
        o1 = jnp.where(row < m_total, o1, 0.0)
    pp = o1.shape[1]
    st_ref[0:1, 0:1, :] = jnp.sum(o1, axis=0, keepdims=True).reshape(1, 1, pp)
    st_ref[0:1, 1:2, :] = jnp.sum(o1 * o1, axis=0, keepdims=True).reshape(1, 1, pp)


# --------------------------------------------------------------------------- #
# Pass C: relu(bn2(.)) -> conv2 (3x3, stride, pad=1), per image
# --------------------------------------------------------------------------- #
def _conv2_kernel(out1_ref, s2_ref, w2_ref, out2_ref, st_ref, hp_ref, acc_ref,
                  *, H, W, Pp, stride):
    Ho = (H - 1) // stride + 1
    Wo = (W - 1) // stride + 1
    scale = s2_ref[0:1, :].reshape(1, 1, Pp)
    shift = s2_ref[1:2, :].reshape(1, 1, Pp)
    h2 = jnp.maximum(out1_ref[0].astype(jnp.float32) * scale + shift, 0.0)

    # halo-padded bf16 staging: zero only the 1-pixel border strips.
    zr = jnp.zeros((1, W + 2, Pp), jnp.bfloat16)
    zc = jnp.zeros((H + 2, 1, Pp), jnp.bfloat16)
    hp_ref[0:1, :, :] = zr
    hp_ref[H + 1:H + 2, :, :] = zr
    hp_ref[:, 0:1, :] = zc
    hp_ref[:, W + 1:W + 2, :] = zc
    hp_ref[1:H + 1, 1:W + 1, :] = h2.astype(jnp.bfloat16)

    # 3x3 conv = 9 accumulated MXU matmuls (K = Pp per tap) into an f32 VMEM
    # accumulator -- no im2col buffer, no large vector-store traffic.
    # TODO(synk): for stride > 1, space-to-depth hp_ref once so each tap is a
    # contiguous window instead of a sublane-strided read.
    for di in range(3):
        for dj in range(3):
            tap = 3 * di + dj
            if stride == 1:
                win = hp_ref[di:di + Ho, dj:dj + Wo, :]
            else:
                win = hp_ref[pl.ds(di, Ho, stride), pl.ds(dj, Wo, stride), :]
            d = jnp.dot(win.reshape(Ho * Wo, Pp), w2_ref[tap],
                        preferred_element_type=jnp.float32)
            if tap == 0:
                acc_ref[...] = d
            else:
                acc_ref[...] += d

    acc = acc_ref[...]
    out2_ref[...] = acc.reshape(1, Ho, Wo, Pp).astype(jnp.bfloat16)
    st_ref[0:1, 0:1, :] = jnp.sum(acc, axis=0, keepdims=True).reshape(1, 1, Pp)
    st_ref[0:1, 1:2, :] = jnp.sum(acc * acc, axis=0, keepdims=True).reshape(1, 1, Pp)


# --------------------------------------------------------------------------- #
# Pass D: relu(bn3(.)) -> conv3 (1x1 expand) + shortcut
# --------------------------------------------------------------------------- #
def _bn3_conv3_id_kernel(out2_ref, s3_ref, w3_ref, xsc_ref, out_ref):
    h3 = jnp.maximum(out2_ref[...].astype(jnp.float32) * s3_ref[0:1, :]
                     + s3_ref[1:2, :], 0.0)
    y = jnp.dot(h3.astype(jnp.bfloat16), w3_ref[...],
                preferred_element_type=jnp.float32)
    out_ref[...] = y + xsc_ref[...]


def _bn3_conv3_proj_kernel(out2_ref, s3_ref, w3_ref, xsc_ref, s1_ref, wsc_ref,
                           out_ref):
    h3 = jnp.maximum(out2_ref[...].astype(jnp.float32) * s3_ref[0:1, :]
                     + s3_ref[1:2, :], 0.0)
    y = jnp.dot(h3.astype(jnp.bfloat16), w3_ref[...],
                preferred_element_type=jnp.float32)
    # projection shortcut recomputed from (subsampled) x: relu(bn1(x)) @ wsc
    pre = jnp.maximum(xsc_ref[...] * s1_ref[0:1, :] + s1_ref[1:2, :], 0.0)
    y = y + jnp.dot(pre.astype(jnp.bfloat16), wsc_ref[...],
                    preferred_element_type=jnp.float32)
    out_ref[...] = y


# --------------------------------------------------------------------------- #
# Wrapper: NCHW in / NCHW out
# --------------------------------------------------------------------------- #
def preact_bottleneck(x_nchw, params, stride):
    x = jnp.transpose(x_nchw, (0, 2, 3, 1)).astype(jnp.float32)      # -> NHWC
    N, H, W, Cin = x.shape
    P = params['w1'].shape[0]
    C4 = EXPANSION * P
    has_shortcut = 'wsc' in params
    if not has_shortcut:
        assert stride == 1 and Cin == C4, (
            "identity shortcut requires stride == 1 and in_planes == 4 * planes")

    Ho = (H - 1) // stride + 1
    Wo = (W - 1) // stride + 1
    M, Mo = N * H * W, N * Ho * Wo
    Pp, C4p = _round_up(P, LANE), _round_up(C4, LANE)

    # -- parameter plumbing: torch OIHW conv weights -> bf16 matmul matrices.
    #    Only the internal channel dims (P, 4P) are padded to 128 (matmul N
    #    dims -> lane-dense outputs); the input-channel dim Cin stays unpadded
    #    so x is never re-materialized channel-padded in HBM.
    w1 = _pad_last(params['w1'][:, :, 0, 0].T, Pp).astype(jnp.bfloat16)       # (Cin, Pp)
    w2 = jnp.transpose(params['w2'], (2, 3, 1, 0))                            # (3,3,in,out)
    w2 = jnp.pad(w2, ((0, 0), (0, 0), (0, Pp - P), (0, Pp - P)))
    w2 = w2.reshape(9, Pp, Pp).astype(jnp.bfloat16)                           # (9, Pp, Pp)
    w3 = _pad2(params['w3'][:, :, 0, 0].T, Pp, C4p).astype(jnp.bfloat16)      # (Pp, C4p)
    wsc = (_pad_last(params['wsc'][:, :, 0, 0].T, C4p).astype(jnp.bfloat16)
           if has_shortcut else None)                                         # (Cin, C4p)
    g1, b1 = params['g1'], params['b1']                                       # (Cin,)
    g2, b2 = _pad_last(params['g2'], Pp), _pad_last(params['b2'], Pp)
    g3, b3 = _pad_last(params['g3'], Pp), _pad_last(params['b3'], Pp)

    x2d = x.reshape(M, Cin)                               # (M, Cin) f32, no pad

    # ---------------- Pass A: bn1 batch statistics ---------------------------
    tile_a = _pick_tile(M, 4 * Cin)
    na = pl.cdiv(M, tile_a)
    st_x = pl.pallas_call(
        functools.partial(_stats_kernel, m_total=M, tile=tile_a,
                          need_mask=(M % tile_a != 0)),
        grid=(na,),
        in_specs=[pl.BlockSpec((tile_a, Cin), lambda i: (i, 0))],
        out_specs=pl.BlockSpec((1, 2, Cin), lambda i: (i, 0, 0)),
        out_shape=jax.ShapeDtypeStruct((na, 2, Cin), jnp.float32),
        compiler_params=_COMPILER_PARAMS,
    )(x2d).sum(axis=0)
    s1 = _bn_scale_shift(st_x, M, g1, b1)                                     # (2, Cin)

    # ------- Pass B: relu(bn1) -> conv1 (1x1) + fused bn2 partial stats ------
    tile_b = _pick_tile(M, 4 * Cin + 2 * Pp)
    nb = pl.cdiv(M, tile_b)
    out1, st1 = pl.pallas_call(
        functools.partial(_bn1_conv1_kernel, m_total=M, tile=tile_b,
                          need_mask=(M % tile_b != 0)),
        grid=(nb,),
        in_specs=[pl.BlockSpec((tile_b, Cin), lambda i: (i, 0)),
                  pl.BlockSpec((2, Cin), lambda i: (0, 0)),
                  pl.BlockSpec((Cin, Pp), lambda i: (0, 0))],
        out_specs=(pl.BlockSpec((tile_b, Pp), lambda i: (i, 0)),
                   pl.BlockSpec((1, 2, Pp), lambda i: (i, 0, 0))),
        out_shape=(jax.ShapeDtypeStruct((M, Pp), jnp.bfloat16),
                   jax.ShapeDtypeStruct((nb, 2, Pp), jnp.float32)),
        compiler_params=_COMPILER_PARAMS,
    )(x2d, s1, w1)
    s2 = _bn_scale_shift(st1.sum(axis=0), M, g2, b2)                          # (2, Pp)

    # ------- Pass C: relu(bn2) -> conv2 3x3 (9 accumulated MXU matmuls) ------
    out1_4d = out1.reshape(N, H, W, Pp)
    out2_4d, st2 = pl.pallas_call(
        functools.partial(_conv2_kernel, H=H, W=W, Pp=Pp, stride=stride),
        grid=(N,),
        in_specs=[pl.BlockSpec((1, H, W, Pp), lambda n: (n, 0, 0, 0)),
                  pl.BlockSpec((2, Pp), lambda n: (0, 0)),
                  pl.BlockSpec((9, Pp, Pp), lambda n: (0, 0, 0))],
        out_specs=(pl.BlockSpec((1, Ho, Wo, Pp), lambda n: (n, 0, 0, 0)),
                   pl.BlockSpec((1, 2, Pp), lambda n: (n, 0, 0))),
        out_shape=(jax.ShapeDtypeStruct((N, Ho, Wo, Pp), jnp.bfloat16),
                   jax.ShapeDtypeStruct((N, 2, Pp), jnp.float32)),
        scratch_shapes=[pltpu.VMEM((H + 2, W + 2, Pp), jnp.bfloat16),  # halo buf
                        pltpu.VMEM((Ho * Wo, Pp), jnp.float32)],       # f32 acc
        compiler_params=_COMPILER_PARAMS,
    )(out1_4d, s2, w2)
    s3 = _bn_scale_shift(st2.sum(axis=0), Mo, g3, b3)                         # (2, Pp)

    # ------- Pass D: relu(bn3) -> conv3 (1x1 expand) + shortcut --------------
    out2 = out2_4d.reshape(Mo, Pp)
    if has_shortcut:
        # projection shortcut: recomputed here from (host-subsampled) x instead
        # of being written to / re-read from HBM by an earlier pass.
        xs = x if stride == 1 else x[:, ::stride, ::stride, :]
        xsc = xs.reshape(Mo, Cin)
        tile_d = _pick_tile(Mo, 2 * Pp + 4 * Cin + 4 * C4p)
        nd = pl.cdiv(Mo, tile_d)
        y2d = pl.pallas_call(
            _bn3_conv3_proj_kernel,
            grid=(nd,),
            in_specs=[pl.BlockSpec((tile_d, Pp), lambda i: (i, 0)),
                      pl.BlockSpec((2, Pp), lambda i: (0, 0)),
                      pl.BlockSpec((Pp, C4p), lambda i: (0, 0)),
                      pl.BlockSpec((tile_d, Cin), lambda i: (i, 0)),
                      pl.BlockSpec((2, Cin), lambda i: (0, 0)),
                      pl.BlockSpec((Cin, C4p), lambda i: (0, 0))],
            out_specs=pl.BlockSpec((tile_d, C4p), lambda i: (i, 0)),
            out_shape=jax.ShapeDtypeStruct((Mo, C4p), jnp.float32),
            compiler_params=_COMPILER_PARAMS,
        )(out2, s3, w3, xsc, s1, wsc)
    else:
        # identity shortcut: add x directly (pad is a no-op when 4P % 128 == 0)
        xsc = _pad_last(x.reshape(Mo, C4), C4p)
        tile_d = _pick_tile(Mo, 2 * Pp + 8 * C4p)
        nd = pl.cdiv(Mo, tile_d)
        y2d = pl.pallas_call(
            _bn3_conv3_id_kernel,
            grid=(nd,),
            in_specs=[pl.BlockSpec((tile_d, Pp), lambda i: (i, 0)),
                      pl.BlockSpec((2, Pp), lambda i: (0, 0)),
                      pl.BlockSpec((Pp, C4p), lambda i: (0, 0)),
                      pl.BlockSpec((tile_d, C4p), lambda i: (i, 0))],
            out_specs=pl.BlockSpec((tile_d, C4p), lambda i: (i, 0)),
            out_shape=jax.ShapeDtypeStruct((Mo, C4p), jnp.float32),
            compiler_params=_COMPILER_PARAMS,
        )(out2, s3, w3, xsc)

    y = y2d.reshape(N, Ho, Wo, C4p)[:, :, :, :C4]
    return jnp.transpose(y, (0, 3, 1, 2))                                     # -> NCHW


# ------------------------- pure-JAX f32 reference (NCHW) ---------------------
def _ref_forward(x, p, stride):
    def bn(y, g, b):
        m = y.mean(axis=(0, 2, 3), keepdims=True)
        v = ((y - m) ** 2).mean(axis=(0, 2, 3), keepdims=True)
        return (y - m) / jnp.sqrt(v + EPS) * g.reshape(1, -1, 1, 1) + b.reshape(1, -1, 1, 1)

    def conv(y, w, s=1, pad=0):
        return jax.lax.conv_general_dilated(
            y, w, (s, s), [(pad, pad), (pad, pad)],
            dimension_numbers=('NCHW', 'OIHW', 'NCHW'))

    out = jax.nn.relu(bn(x, p['g1'], p['b1']))
    inp = out
    out = conv(out, p['w1'])
    out = jax.nn.relu(bn(out, p['g2'], p['b2']))
    out = conv(out, p['w2'], stride, 1)
    out = jax.nn.relu(bn(out, p['g3'], p['b3']))
    out = conv(out, p['w3'])
    sc = conv(inp, p['wsc'], stride) if 'wsc' in p else x
    return out + sc


def _make_params(key, in_planes, planes, stride):
    ks = jax.random.split(key, 10)
    nrm = lambda k, s: 0.1 * jax.random.normal(k, s, jnp.float32)
    p = {
        'g1': 1.0 + nrm(ks[0], (in_planes,)), 'b1': nrm(ks[1], (in_planes,)),
        'w1': nrm(ks[2], (planes, in_planes, 1, 1)),
        'g2': 1.0 + nrm(ks[3], (planes,)),    'b2': nrm(ks[4], (planes,)),
        'w2': nrm(ks[5], (planes, planes, 3, 3)),
        'g3': 1.0 + nrm(ks[6], (planes,)),    'b3': nrm(ks[7], (planes,)),
        'w3': nrm(ks[8], (EXPANSION * planes, planes, 1, 1)),
    }
    if stride != 1 or in_planes != EXPANSION * planes:
        p['wsc'] = nrm(ks[9], (EXPANSION * planes, in_planes, 1, 1))
    return p


if __name__ == "__main__":
    key = jax.random.PRNGKey(0)
    k1, k2, k3, k4 = jax.random.split(key, 4)

    # Tolerance note: matmul operands run in bf16 on the MXU (f32 accumulation)
    # and the inter-pass activations are stored bf16, while the reference is
    # pure f32; three BatchNorm normalizations amplify the rounding.
    ATOL = RTOL = 6e-2

    # --- Test 1: projection shortcut (in_planes != 4*planes), stride = 1 -----
    N, Cin, H, W, planes, stride = 2, 4, 32, 32, 4, 1
    x = jax.random.normal(k1, (N, Cin, H, W), jnp.float32)       # NCHW, like PyTorch
    params = _make_params(k2, Cin, planes, stride)
    out = jax.block_until_ready(preact_bottleneck(x, params, stride))
    ref = _ref_forward(x, params, stride)
    assert out.shape == ref.shape, (out.shape, ref.shape)
    assert jnp.allclose(out, ref, atol=ATOL, rtol=RTOL), float(jnp.abs(out - ref).max())

    # --- Test 2: identity shortcut (in_planes == 4*planes), stride = 1 -------
    N2, Cin2, H2, W2, planes2 = 2, 16, 16, 16, 4
    x2 = jax.random.normal(k3, (N2, Cin2, H2, W2), jnp.float32)
    params2 = _make_params(k4, Cin2, planes2, 1)
    out2 = jax.block_until_ready(preact_bottleneck(x2, params2, 1))
    ref2 = _ref_forward(x2, params2, 1)
    assert out2.shape == ref2.shape, (out2.shape, ref2.shape)
    assert jnp.allclose(out2, ref2, atol=ATOL, rtol=RTOL), float(jnp.abs(out2 - ref2).max())

    print("KERNEL_OK")
</pallas_src>

<mosaic_0001>
module attributes {stable_mosaic.version = 11 : i64} {
  func.func @_stats_kernel(%arg0: i32, %arg1: memref<1024x4xf32, #tpu.memory_space<vmem>>, %arg2: memref<1x2x4xf32, #tpu.memory_space<vmem>>) attributes {dimension_semantics = [#tpu.dimension_semantics<parallel>], iteration_bounds = array<i64: 2>, scalar_prefetch = 0 : i64, scratch_operands = 0 : i64, tpu.core_type = #tpu.core_type<tc>, window_params = [{transform_indices = @transform_0, window_bounds = array<i64: 1024, 4>}, {transform_indices = @transform_1, window_bounds = array<i64: 1, 2, 4>}]} {
    %c0 = arith.constant 0 : index
    %c0_0 = arith.constant 0 : index
    %0 = vector.load %arg1[%c0, %c0_0] : memref<1024x4xf32, #tpu.memory_space<vmem>>, vector<1024x4xf32>
    %cst = arith.constant dense<0.000000e+00> : vector<4xf32>
    %1 = vector.multi_reduction <add>, %0, %cst [0] : vector<1024x4xf32> to vector<4xf32>
    %2 = vector.shape_cast %1 : vector<4xf32> to vector<1x4xf32>
    %3 = vector.shape_cast %2 : vector<1x4xf32> to vector<1x1x4xf32>
    %c0_1 = arith.constant 0 : index
    %c0_2 = arith.constant 0 : index
    %c0_3 = arith.constant 0 : index
    %4 = vector.load %arg2[%c0_1, %c0_2, %c0_3] : memref<1x2x4xf32, #tpu.memory_space<vmem>>, vector<1x1x4xf32>
    tpu.vector_store %arg2[%c0_1, %c0_2, %c0_3], %3 {strides = array<i32>} : memref<1x2x4xf32, #tpu.memory_space<vmem>>, vector<1x1x4xf32>,
    %5 = arith.mulf %0, %0 : vector<1024x4xf32>
    %cst_4 = arith.constant dense<0.000000e+00> : vector<4xf32>
    %6 = vector.multi_reduction <add>, %5, %cst_4 [0] : vector<1024x4xf32> to vector<4xf32>
    %7 = vector.shape_cast %6 : vector<4xf32> to vector<1x4xf32>
    %8 = vector.shape_cast %7 : vector<1x4xf32> to vector<1x1x4xf32>
    %c0_5 = arith.constant 0 : index
    %c1 = arith.constant 1 : index
    %c0_6 = arith.constant 0 : index
    %9 = vector.load %arg2[%c0_5, %c1, %c0_6] : memref<1x2x4xf32, #tpu.memory_space<vmem>>, vector<1x1x4xf32>
    tpu.vector_store %arg2[%c0_5, %c1, %c0_6], %8 {strides = array<i32>} : memref<1x2x4xf32, #tpu.memory_space<vmem>>, vector<1x1x4xf32>,
    return
  }
  func.func @transform_0(%arg0: i32) -> (i32, i32) {
    %c0_i32 = arith.constant 0 : i32
    %c0_i32_0 = arith.constant 0 : i32
    return %arg0, %c0_i32 : i32, i32
  }
  func.func @transform_1(%arg0: i32) -> (i32, i32, i32) {
    %c0_i32 = arith.constant 0 : i32
    %c0_i32_0 = arith.constant 0 : i32
    %c0_i32_1 = arith.constant 0 : i32
    return %arg0, %c0_i32, %c0_i32_0 : i32, i32, i32
  }
}

</mosaic_0001>

<llo_original>
// kernel: tpu_custom_call.1
$region0: #{tpu_custom_call.1}
  #allocation0 [shape = 'u32[]', space=smem, size = 0x4, offset = 0x4, fixed_abs, tag = 'smem constant byte address 0x4 - core index']
  #allocation1 [shape = 'u32[144,128]{1,0:T(1,128)}', space=vmem, size = 0x12000, scoped, tag = 'internal scratch']
  %s0 = inlined_call_operand.vmem [shape: f32[2048,4], index: 0, kind: input, shape index: {}]
  %s1 = inlined_call_operand.hbm [shape: f32[2,2,4], index: 1, kind: output, shape index: {}]
  %s2 = sld [smem:[#allocation0]]
  $region37: #{tpu_custom_call.1} parent=0
    _
  %s4 = ssub.s32 1, %s2
  %s5 = scalar_select 0, %s4, %s2
  $region1: #{tpu_custom_call.1} parent=0
    #allocation2 [shape = 'u8[2048]{0}', space=vmem, size = 0x800, scoped, tag = 'output window, operand 0']
    #allocation3 [shape = 's32[2]{0}', space=sflag, size = 0x8, scoped, tag = 'scoped memory for tpu_custom_call.1']
    %6 = vsyncpa [#allocation3], 0
    %s7 = scalar_lea.sflag [#allocation3], 1
    %8 = vsyncpa %s7, 0
    loop: start=0, step=1, limit=4
    $region2: #{tpu_custom_call.1} parent=1 // loop_pre_header
      _
    $region3: #{tpu_custom_call.1} parent=1 // loop_header
      %s10 = sphi 0, %s14
      %p11 = scmp.ge.s32.totalorder %s10, 4
      %s20 = sphi 0, %s22
      %s23 = sphi 0, %s20
      %s24 = sphi 0, %s23
      %s40 = sphi 0, %s24
      %s46 = sphi 0, %s48
      %s49 = sphi 0, %s46
      %s50 = sphi 0, %s49
      %s66 = sphi 0, %s50
    $region4: #{tpu_custom_call.1} parent=1 // loop_header_branch
      %13 = sbr.rel (%p11) target = $region8
    $region5: #{tpu_custom_call.1} parent=1 // loop_body
      %s15 = ssub.s32 %s10, 1
      %s16 = ssub.s32 %s10, 2
      %s17 = sadd.s32 %s10, 1
      %s18 = ssub.s32 %s10, %s17
      %p19 = scmp.eq.s32.totalorder %s18, 0
      %s21 = sadd.s32 %s20, 1
      %s22 = scalar_select %p19, %s20, %s21
      %p25 = pneg %p19
      %p26 = scmp.eq.s32.totalorder %s10, 1
      %p27 = por %p25, %p26
      %p28 = scmp.ne.s32.totalorder %s20, %s23
      %p29 = scmp.eq.s32.totalorder %s10, 0
      %p30 = por %p28, %p29
      %p31 = scmp.ne.s32.totalorder %s20, %s23
      %p32 = scmp.eq.s32.totalorder %s15, 1
      %p33 = por %p31, %p32
      %p34 = scmp.ne.s32.totalorder %s23, %s24
      %p35 = scmp.eq.s32.totalorder %s15, 0
      %p36 = por %p34, %p35
      %p37 = scmp.ne.s32.totalorder %s23, %s24
      %p38 = scmp.eq.s32.totalorder %s16, 1
      %p39 = por %p37, %p38
      %p41 = scmp.ne.s32.totalorder %s24, %s40
      %p42 = scmp.eq.s32.totalorder %s16, 0
      %p43 = por %p41, %p42
      %s44 = ssub.s32 %s10, %s17
      %p45 = scmp.eq.s32.totalorder %s44, 0
      %s47 = sadd.s32 %s46, 1
      %s48 = scalar_select %p45, %s46, %s47
      %p51 = pneg %p45
      %p52 = scmp.eq.s32.totalorder %s10, 1
      %p53 = por %p51, %p52
      %p54 = scmp.ne.s32.totalorder %s46, %s49
      %p55 = scmp.eq.s32.totalorder %s10, 0
      %p56 = por %p54, %p55
      %p57 = scmp.ne.s32.totalorder %s46, %s49
      %p58 = scmp.eq.s32.totalorder %s15, 1
      %p59 = por %p57, %p58
      %p60 = scmp.ne.s32.totalorder %s49, %s50
      %p61 = scmp.eq.s32.totalorder %s15, 0
      %p62 = por %p60, %p61
      %p63 = scmp.ne.s32.totalorder %s49, %s50
      %p64 = scmp.eq.s32.totalorder %s16, 1
      %p65 = por %p63, %p64
      %p67 = scmp.ne.s32.totalorder %s50, %s66
      %p68 = scmp.eq.s32.totalorder %s16, 0
      %p69 = por %p67, %p68
      %p70 = scmp.le.s32.totalorder 1, %s10
      %p71 = scmp.lt.s32.totalorder %s10, 3
      %p72 = pnand %p70, %p71
      %p73 = pneg %p72
      // Predicated region
      $region9: #{tpu_custom_call.1} parent=5 // pred_check
        _
      $region10: #{tpu_custom_call.1} parent=5 // pred_check_branch
        %75 = sbr.rel (%p72) target = $region12
      $region11: #{tpu_custom_call.1} parent=5 // pred_region
        %s76 = ssub.s32 %s10, 1
      $region12: #{tpu_custom_call.1} parent=5 // pred_fallthru
        _
      %p77 = scmp.lt.s32.totalorder %s10, 2
      // Predicated region
      $region13: #{tpu_custom_call.1} parent=5 // pred_check
        %p78 = pneg %p77
      $region14: #{tpu_custom_call.1} parent=5 // pred_check_branch
        %80 = sbr.rel (%p78) target = $region16
      $region15: #{tpu_custom_call.1} parent=5 // pred_region
        // Predicated region
        $region17: #{tpu_custom_call.1} parent=15 // pred_check
          %p81 = pneg %p30
        $region18: #{tpu_custom_call.1} parent=15 // pred_check_branch
          %83 = sbr.rel (%p81) target = $region20
        $region19: #{tpu_custom_call.1} parent=15 // pred_region
          %s84 = smul.u32 128, %s10
          %p85 = scmp.lt.s32.totalorder %s84, 255
          %s86 = scalar_select %p85, %s84, 255
          %s87 = smul.addr %s86, 8
          %s88 = scalar_lea.vmem %s0, %s87
          %s89 = smul.u32 128, %s10
        $region20: #{tpu_custom_call.1} parent=15 // pred_fallthru
          _
      $region16: #{tpu_custom_call.1} parent=5 // pred_fallthru
        _
      %p90 = scmp.le.s32.totalorder 1, %s10
      %p91 = scmp.lt.s32.totalorder %s10, 3
      %p92 = pnand %p90, %p91
      %p93 = pneg %p92
      // Predicated region
      $region21: #{tpu_custom_call.1} parent=5 // pred_check
        _
      $region22: #{tpu_custom_call.1} parent=5 // pred_check_branch
        %95 = sbr.rel (%p92) target = $region24
      $region23: #{tpu_custom_call.1} parent=5 // pred_region
        %s96 = ssub.s32 %s10, 1
        %s97 = smul.u32 128, %s15
        %p98 = scmp.lt.s32.totalorder %s97, 255
        %s99 = scalar_select %p98, %s97, 255
        %s100 = smul.addr %s99, 8
        %s101 = scalar_lea.vmem %s0, %s100
        %p102 = pneg %p36
        %p103 = pneg %p33
        %p104 = pneg %p62
        %p105 = pneg %p59
        %s106 = sand.u32 %s49, 1
        %s107 = scalar_lea.sflag [#allocation3], %s106
        %s108 = sand.u32 %s49, 1
        %s109 = smul.addr %s108, 2
        %s110 = scalar_lea.vmem [#allocation2], %s109
        %s111 = smul.u32 128, %s15
        %p112 = scmp.lt.s32.totalorder %s111, 255
        %s113 = scalar_select %p112, %s111, 255
        %s114 = smul.addr %s113, 8
        %s115 = scalar_lea.vmem %s0, %s114
        %s116 = smul.u32 128, %s15
        %v117 = vld [vmem:[%s115] sm:$0xff]
        %v118 = vld [vmem:[%s115 + $0x8] sm:$0xff]
        %v119 = vld [vmem:[%s115 + $0x10] sm:$0xff]
        %v120 = vld [vmem:[%s115 + $0x18] sm:$0xff]
        %v121 = vld [vmem:[%s115 + $0x20] sm:$0xff]
        %v122 = vld [vmem:[%s115 + $0x28] sm:$0xff]
        %v123 = vld [vmem:[%s115 + $0x30] sm:$0xff]
        %v124 = vld [vmem:[%s115 + $0x38] sm:$0xff]
        %v125 = vld [vmem:[%s115 + $0x40] sm:$0xff]
        %v126 = vld [vmem:[%s115 + $0x48] sm:$0xff]
        %v127 = vld [vmem:[%s115 + $0x50] sm:$0xff]
        %v128 = vld [vmem:[%s115 + $0x58] sm:$0xff]
        %v129 = vld [vmem:[%s115 + $0x60] sm:$0xff]
        %v130 = vld [vmem:[%s115 + $0x68] sm:$0xff]
        %v131 = vld [vmem:[%s115 + $0x70] sm:$0xff]
        %v132 = vld [vmem:[%s115 + $0x78] sm:$0xff]
        %v133 = vld [vmem:[%s115 + $0x80] sm:$0xff]
        %v134 = vld [vmem:[%s115 + $0x88] sm:$0xff]
        %v135 = vld [vmem:[%s115 + $0x90] sm:$0xff]
        %v136 = vld [vmem:[%s115 + $0x98] sm:$0xff]
        %v137 = vld [vmem:[%s115 + $0xa0] sm:$0xff]
        %v138 = vld [vmem:[%s115 + $0xa8] sm:$0xff]
        %v139 = vld [vmem:[%s115 + $0xb0] sm:$0xff]
        %v140 = vld [vmem:[%s115 + $0xb8] sm:$0xff]
        %v141 = vld [vmem:[%s115 + $0xc0] sm:$0xff]
        %v142 = vld [vmem:[%s115 + $0xc8] sm:$0xff]
        %v143 = vld [vmem:[%s115 + $0xd0] sm:$0xff]
        %v144 = vld [vmem:[%s115 + $0xd8] sm:$0xff]
        %v145 = vld [vmem:[%s115 + $0xe0] sm:$0xff]
        %v146 = vld [vmem:[%s115 + $0xe8] sm:$0xff]
        %v147 = vld [vmem:[%s115 + $0xf0] sm:$0xff]
        %v148 = vld [vmem:[%s115 + $0xf8] sm:$0xff]
        %v149 = vld [vmem:[%s115 + $0x100] sm:$0xff]
        %v150 = vld [vmem:[%s115 + $0x108] sm:$0xff]
        %v151 = vld [vmem:[%s115 + $0x110] sm:$0xff]
        %v152 = vld [vmem:[%s115 + $0x118] sm:$0xff]
        %v153 = vld [vmem:[%s115 + $0x120] sm:$0xff]
        %v154 = vld [vmem:[%s115 + $0x128] sm:$0xff]
        %v155 = vld [vmem:[%s115 + $0x130] sm:$0xff]
        %v156 = vld [vmem:[%s115 + $0x138] sm:$0xff]
        %v157 = vld [vmem:[%s115 + $0x140] sm:$0xff]
        %v158 = vld [vmem:[%s115 + $0x148] sm:$0xff]
        %v159 = vld [vmem:[%s115 + $0x150] sm:$0xff]
        %v160 = vld [vmem:[%s115 + $0x158] sm:$0xff]
        %v161 = vld [vmem:[%s115 + $0x160] sm:$0xff]
        %v162 = vld [vmem:[%s115 + $0x168] sm:$0xff]
        %v163 = vld [vmem:[%s115 + $0x170] sm:$0xff]
        %v164 = vld [vmem:[%s115 + $0x178] sm:$0xff]
        %v165 = vld [vmem:[%s115 + $0x180] sm:$0xff]
        %v166 = vld [vmem:[%s115 + $0x188] sm:$0xff]
        %v167 = vld [vmem:[%s115 + $0x190] sm:$0xff]
        %v168 = vld [vmem:[%s115 + $0x198] sm:$0xff]
        %v169 = vld [vmem:[%s115 + $0x1a0] sm:$0xff]
        %v170 = vld [vmem:[%s115 + $0x1a8] sm:$0xff]
        %v171 = vld [vmem:[%s115 + $0x1b0] sm:$0xff]
        %v172 = vld [vmem:[%s115 + $0x1b8] sm:$0xff]
        %v173 = vld [vmem:[%s115 + $0x1c0] sm:$0xff]
        %v174 = vld [vmem:[%s115 + $0x1c8] sm:$0xff]
        %v175 = vld [vmem:[%s115 + $0x1d0] sm:$0xff]
        %v176 = vld [vmem:[%s115 + $0x1d8] sm:$0xff]
        %v177 = vld [vmem:[%s115 + $0x1e0] sm:$0xff]
        %v178 = vld [vmem:[%s115 + $0x1e8] sm:$0xff]
        %v179 = vld [vmem:[%s115 + $0x1f0] sm:$0xff]
        %v180 = vld [vmem:[%s115 + $0x1f8] sm:$0xff]
        %v181 = vld [vmem:[%s115 + $0x200] sm:$0xff]
        %v182 = vld [vmem:[%s115 + $0x208] sm:$0xff]
        %v183 = vld [vmem:[%s115 + $0x210] sm:$0xff]
        %v184 = vld [vmem:[%s115 + $0x218] sm:$0xff]
        %v185 = vld [vmem:[%s115 + $0x220] sm:$0xff]
        %v186 = vld [vmem:[%s115 + $0x228] sm:$0xff]
        %v187 = vld [vmem:[%s115 + $0x230] sm:$0xff]
        %v188 = vld [vmem:[%s115 + $0x238] sm:$0xff]
        %v189 = vld [vmem:[%s115 + $0x240] sm:$0xff]
        %v190 = vld [vmem:[%s115 + $0x248] sm:$0xff]
        %v191 = vld [vmem:[%s115 + $0x250] sm:$0xff]
        %v192 = vld [vmem:[%s115 + $0x258] sm:$0xff]
        %v193 = vld [vmem:[%s115 + $0x260] sm:$0xff]
        %v194 = vld [vmem:[%s115 + $0x268] sm:$0xff]
        %v195 = vld [vmem:[%s115 + $0x270] sm:$0xff]
        %v196 = vld [vmem:[%s115 + $0x278] sm:$0xff]
        %v197 = vld [vmem:[%s115 + $0x280] sm:$0xff]
        %v198 = vld [vmem:[%s115 + $0x288] sm:$0xff]
        %v199 = vld [vmem:[%s115 + $0x290] sm:$0xff]
        %v200 = vld [vmem:[%s115 + $0x298] sm:$0xff]
        %v201 = vld [vmem:[%s115 + $0x2a0] sm:$0xff]
        %v202 = vld [vmem:[%s115 + $0x2a8] sm:$0xff]
        %v203 = vld [vmem:[%s115 + $0x2b0] sm:$0xff]
        %v204 = vld [vmem:[%s115 + $0x2b8] sm:$0xff]
        %v205 = vld [vmem:[%s115 + $0x2c0] sm:$0xff]
        %v206 = vld [vmem:[%s115 + $0x2c8] sm:$0xff]
        %v207 = vld [vmem:[%s115 + $0x2d0] sm:$0xff]
        %v208 = vld [vmem:[%s115 + $0x2d8] sm:$0xff]
        %v209 = vld [vmem:[%s115 + $0x2e0] sm:$0xff]
        %v210 = vld [vmem:[%s115 + $0x2e8] sm:$0xff]
        %v211 = vld [vmem:[%s115 + $0x2f0] sm:$0xff]
        %v212 = vld [vmem:[%s115 + $0x2f8] sm:$0xff]
        %v213 = vld [vmem:[%s115 + $0x300] sm:$0xff]
        %v214 = vld [vmem:[%s115 + $0x308] sm:$0xff]
        %v215 = vld [vmem:[%s115 + $0x310] sm:$0xff]
        %v216 = vld [vmem:[%s115 + $0x318] sm:$0xff]
        %v217 = vld [vmem:[%s115 + $0x320] sm:$0xff]
        %v218 = vld [vmem:[%s115 + $0x328] sm:$0xff]
        %v219 = vld [vmem:[%s115 + $0x330] sm:$0xff]
        %v220 = vld [vmem:[%s115 + $0x338] sm:$0xff]
        %v221 = vld [vmem:[%s115 + $0x340] sm:$0xff]
        %v222 = vld [vmem:[%s115 + $0x348] sm:$0xff]
        %v223 = vld [vmem:[%s115 + $0x350] sm:$0xff]
        %v224 = vld [vmem:[%s115 + $0x358] sm:$0xff]
        %v225 = vld [vmem:[%s115 + $0x360] sm:$0xff]
        %v226 = vld [vmem:[%s115 + $0x368] sm:$0xff]
        %v227 = vld [vmem:[%s115 + $0x370] sm:$0xff]
        %v228 = vld [vmem:[%s115 + $0x378] sm:$0xff]
        %v229 = vld [vmem:[%s115 + $0x380] sm:$0xff]
        %v230 = vld [vmem:[%s115 + $0x388] sm:$0xff]
        %v231 = vld [vmem:[%s115 + $0x390] sm:$0xff]
        %v232 = vld [vmem:[%s115 + $0x398] sm:$0xff]
        %v233 = vld [vmem:[%s115 + $0x3a0] sm:$0xff]
        %v234 = vld [vmem:[%s115 + $0x3a8] sm:$0xff]
        %v235 = vld [vmem:[%s115 + $0x3b0] sm:$0xff]
        %v236 = vld [vmem:[%s115 + $0x3b8] sm:$0xff]
        %v237 = vld [vmem:[%s115 + $0x3c0] sm:$0xff]
        %v238 = vld [vmem:[%s115 + $0x3c8] sm:$0xff]
        %v239 = vld [vmem:[%s115 + $0x3d0] sm:$0xff]
        %v240 = vld [vmem:[%s115 + $0x3d8] sm:$0xff]
        %v241 = vld [vmem:[%s115 + $0x3e0] sm:$0xff]
        %v242 = vld [vmem:[%s115 + $0x3e8] sm:$0xff]
        %v243 = vld [vmem:[%s115 + $0x3f0] sm:$0xff]
        %v244 = vld [vmem:[%s115 + $0x3f8] sm:$0xff]
        %vm245 = vcmask 31744
        %v246 = vsel %vm245, %v117, 0.0
        %v247 = vsel %vm245, %v118, 0.0
        %v248 = vadd.f32 %v246, %v247
        %v249 = vsel %vm245, %v119, 0.0
        %v250 = vadd.f32 %v248, %v249
        %v251 = vsel %vm245, %v120, 0.0
        %v252 = vadd.f32 %v250, %v251
        %v253 = vsel %vm245, %v121, 0.0
        %v254 = vadd.f32 %v252, %v253
        %v255 = vsel %vm245, %v122, 0.0
        %v256 = vadd.f32 %v254, %v255
        %v257 = vsel %vm245, %v123, 0.0
        %v258 = vadd.f32 %v256, %v257
        %v259 = vsel %vm245, %v124, 0.0
        %v260 = vadd.f32 %v258, %v259
        %v261 = vsel %vm245, %v125, 0.0
        %v262 = vadd.f32 %v260, %v261
        %v263 = vsel %vm245, %v126, 0.0
        %v264 = vadd.f32 %v262, %v263
        %v265 = vsel %vm245, %v127, 0.0
        %v266 = vadd.f32 %v264, %v265
        %v267 = vsel %vm245, %v128, 0.0
        %v268 = vadd.f32 %v266, %v267
        %v269 = vsel %vm245, %v129, 0.0
        %v270 = vadd.f32 %v268, %v269
        %v271 = vsel %vm245, %v130, 0.0
        %v272 = vadd.f32 %v270, %v271
        %v273 = vsel %vm245, %v131, 0.0
        %v274 = vadd.f32 %v272, %v273
        %v275 = vsel %vm245, %v132, 0.0
        %v276 = vadd.f32 %v274, %v275
        %v277 = vsel %vm245, %v133, 0.0
        %v278 = vadd.f32 %v276, %v277
        %v279 = vsel %vm245, %v134, 0.0
        %v280 = vadd.f32 %v278, %v279
        %v281 = vsel %vm245, %v135, 0.0
        %v282 = vadd.f32 %v280, %v281
        %v283 = vsel %vm245, %v136, 0.0
        %v284 = vadd.f32 %v282, %v283
        %v285 = vsel %vm245, %v137, 0.0
        %v286 = vadd.f32 %v284, %v285
        %v287 = vsel %vm245, %v138, 0.0
        %v288 = vadd.f32 %v286, %v287
        %v289 = vsel %vm245, %v139, 0.0
        %v290 = vadd.f32 %v288, %v289
        %v291 = vsel %vm245, %v140, 0.0
        %v292 = vadd.f32 %v290, %v291
        %v293 = vsel %vm245, %v141, 0.0
        %v294 = vadd.f32 %v292, %v293
        %v295 = vsel %vm245, %v142, 0.0
        %v296 = vadd.f32 %v294, %v295
        %v297 = vsel %vm245, %v143, 0.0
        %v298 = vadd.f32 %v296, %v297
        %v299 = vsel %vm245, %v144, 0.0
        %v300 = vadd.f32 %v298, %v299
        %v301 = vsel %vm245, %v145, 0.0
        %v302 = vadd.f32 %v300, %v301
        %v303 = vsel %vm245, %v146, 0.0
        %v304 = vadd.f32 %v302, %v303
        %v305 = vsel %vm245, %v147, 0.0
        %v306 = vadd.f32 %v304, %v305
        %v307 = vsel %vm245, %v148, 0.0
        %v308 = vadd.f32 %v306, %v307
        %v309 = vsel %vm245, %v149, 0.0
        %v310 = vadd.f32 %v308, %v309
        %v311 = vsel %vm245, %v150, 0.0
        %v312 = vadd.f32 %v310, %v311
        %v313 = vsel %vm245, %v151, 0.0
        %v314 = vadd.f32 %v312, %v313
        %v315 = vsel %vm245, %v152, 0.0
        %v316 = vadd.f32 %v314, %v315
        %v317 = vsel %vm245, %v153, 0.0
        %v318 = vadd.f32 %v316, %v317
        %v319 = vsel %vm245, %v154, 0.0
        %v320 = vadd.f32 %v318, %v319
        %v321 = vsel %vm245, %v155, 0.0
        %v322 = vadd.f32 %v320, %v321
        %v323 = vsel %vm245, %v156, 0.0
        %v324 = vadd.f32 %v322, %v323
        %v325 = vsel %vm245, %v157, 0.0
        %v326 = vadd.f32 %v324, %v325
        %v327 = vsel %vm245, %v158, 0.0
        %v328 = vadd.f32 %v326, %v327
        %v329 = vsel %vm245, %v159, 0.0
        %v330 = vadd.f32 %v328, %v329
        %v331 = vsel %vm245, %v160, 0.0
        %v332 = vadd.f32 %v330, %v331
        %v333 = vsel %vm245, %v161, 0.0
        %v334 = vadd.f32 %v332, %v333
        %v335 = vsel %vm245, %v162, 0.0
        %v336 = vadd.f32 %v334, %v335
        %v337 = vsel %vm245, %v163, 0.0
        %v338 = vadd.f32 %v336, %v337
        %v339 = vsel %vm245, %v164, 0.0
        %v340 = vadd.f32 %v338, %v339
        %v341 = vsel %vm245, %v165, 0.0
        %v342 = vadd.f32 %v340, %v341
        %v343 = vsel %vm245, %v166, 0.0
        %v344 = vadd.f32 %v342, %v343
        %v345 = vsel %vm245, %v167, 0.0
        %v346 = vadd.f32 %v344, %v345
        %v347 = vsel %vm245, %v168, 0.0
        %v348 = vadd.f32 %v346, %v347
        %v349 = vsel %vm245, %v169, 0.0
        %v350 = vadd.f32 %v348, %v349
        %v351 = vsel %vm245, %v170, 0.0
        %v352 = vadd.f32 %v350, %v351
        %v353 = vsel %vm245, %v171, 0.0
        %v354 = vadd.f32 %v352, %v353
        %v355 = vsel %vm245, %v172, 0.0
        %v356 = vadd.f32 %v354, %v355
        %v357 = vsel %vm245, %v173, 0.0
        %v358 = vadd.f32 %v356, %v357
        %v359 = vsel %vm245, %v174, 0.0
        %v360 = vadd.f32 %v358, %v359
        %v361 = vsel %vm245, %v175, 0.0
        %v362 = vadd.f32 %v360, %v361
        %v363 = vsel %vm245, %v176, 0.0
        %v364 = vadd.f32 %v362, %v363
        %v365 = vsel %vm245, %v177, 0.0
        %v366 = vadd.f32 %v364, %v365
        %v367 = vsel %vm245, %v178, 0.0
        %v368 = vadd.f32 %v366, %v367
        %v369 = vsel %vm245, %v179, 0.0
        %v370 = vadd.f32 %v368, %v369
        %v371 = vsel %vm245, %v180, 0.0
        %v372 = vadd.f32 %v370, %v371
        %v373 = vsel %vm245, %v181, 0.0
        %v374 = vadd.f32 %v372, %v373
        %v375 = vsel %vm245, %v182, 0.0
        %v376 = vadd.f32 %v374, %v375
        %v377 = vsel %vm245, %v183, 0.0
        %v378 = vadd.f32 %v376, %v377
        %v379 = vsel %vm245, %v184, 0.0
        %v380 = vadd.f32 %v378, %v379
        %v381 = vsel %vm245, %v185, 0.0
        %v382 = vadd.f32 %v380, %v381
        %v383 = vsel %vm245, %v186, 0.0
        %v384 = vadd.f32 %v382, %v383
        %v385 = vsel %vm245, %v187, 0.0
        %v386 = vadd.f32 %v384, %v385
        %v387 = vsel %vm245, %v188, 0.0
        %v388 = vadd.f32 %v386, %v387
        %v389 = vsel %vm245, %v189, 0.0
        %v390 = vadd.f32 %v388, %v389
        %v391 = vsel %vm245, %v190, 0.0
        %v392 = vadd.f32 %v390, %v391
        %v393 = vsel %vm245, %v191, 0.0
        %v394 = vadd.f32 %v392, %v393
        %v395 = vsel %vm245, %v192, 0.0
        %v396 = vadd.f32 %v394, %v395
        %v397 = vsel %vm245, %v193, 0.0
        %v398 = vadd.f32 %v396, %v397
        %v399 = vsel %vm245, %v194, 0.0
        %v400 = vadd.f32 %v398, %v399
        %v401 = vsel %vm245, %v195, 0.0
        %v402 = vadd.f32 %v400, %v401
        %v403 = vsel %vm245, %v196, 0.0
        %v404 = vadd.f32 %v402, %v403
        %v405 = vsel %vm245, %v197, 0.0
        %v406 = vadd.f32 %v404, %v405
        %v407 = vsel %vm245, %v198, 0.0
        %v408 = vadd.f32 %v406, %v407
        %v409 = vsel %vm245, %v199, 0.0
        %v410 = vadd.f32 %v408, %v409
        %v411 = vsel %vm245, %v200, 0.0
        %v412 = vadd.f32 %v410, %v411
        %v413 = vsel %vm245, %v201, 0.0
        %v414 = vadd.f32 %v412, %v413
        %v415 = vsel %vm245, %v202, 0.0
        %v416 = vadd.f32 %v414, %v415
        %v417 = vsel %vm245, %v203, 0.0
        %v418 = vadd.f32 %v416, %v417
        %v419 = vsel %vm245, %v204, 0.0
        %v420 = vadd.f32 %v418, %v419
        %v421 = vsel %vm245, %v205, 0.0
        %v422 = vadd.f32 %v420, %v421
        %v423 = vsel %vm245, %v206, 0.0
        %v424 = vadd.f32 %v422, %v423
        %v425 = vsel %vm245, %v207, 0.0
        %v426 = vadd.f32 %v424, %v425
        %v427 = vsel %vm245, %v208, 0.0
        %v428 = vadd.f32 %v426, %v427
        %v429 = vsel %vm245, %v209, 0.0
        %v430 = vadd.f32 %v428, %v429
        %v431 = vsel %vm245, %v210, 0.0
        %v432 = vadd.f32 %v430, %v431
        %v433 = vsel %vm245, %v211, 0.0
        %v434 = vadd.f32 %v432, %v433
        %v435 = vsel %vm245, %v212, 0.0
        %v436 = vadd.f32 %v434, %v435
        %v437 = vsel %vm245, %v213, 0.0
        %v438 = vadd.f32 %v436, %v437
        %v439 = vsel %vm245, %v214, 0.0
        %v440 = vadd.f32 %v438, %v439
        %v441 = vsel %vm245, %v215, 0.0
        %v442 = vadd.f32 %v440, %v441
        %v443 = vsel %vm245, %v216, 0.0
        %v444 = vadd.f32 %v442, %v443
        %v445 = vsel %vm245, %v217, 0.0
        %v446 = vadd.f32 %v444, %v445
        %v447 = vsel %vm245, %v218, 0.0
        %v448 = vadd.f32 %v446, %v447
        %v449 = vsel %vm245, %v219, 0.0
        %v450 = vadd.f32 %v448, %v449
        %v451 = vsel %vm245, %v220, 0.0
        %v452 = vadd.f32 %v450, %v451
        %v453 = vsel %vm245, %v221, 0.0
        %v454 = vadd.f32 %v452, %v453
        %v455 = vsel %vm245, %v222, 0.0
        %v456 = vadd.f32 %v454, %v455
        %v457 = vsel %vm245, %v223, 0.0
        %v458 = vadd.f32 %v456, %v457
        %v459 = vsel %vm245, %v224, 0.0
        %v460 = vadd.f32 %v458, %v459
        %v461 = vsel %vm245, %v225, 0.0
        %v462 = vadd.f32 %v460, %v461
        %v463 = vsel %vm245, %v226, 0.0
        %v464 = vadd.f32 %v462, %v463
        %v465 = vsel %vm245, %v227, 0.0
        %v466 = vadd.f32 %v464, %v465
        %v467 = vsel %vm245, %v228, 0.0
        %v468 = vadd.f32 %v466, %v467
        %v469 = vsel %vm245, %v229, 0.0
        %v470 = vadd.f32 %v468, %v469
        %v471 = vsel %vm245, %v230, 0.0
        %v472 = vadd.f32 %v470, %v471
        %v473 = vsel %vm245, %v231, 0.0
        %v474 = vadd.f32 %v472, %v473
        %v475 = vsel %vm245, %v232, 0.0
        %v476 = vadd.f32 %v474, %v475
        %v477 = vsel %vm245, %v233, 0.0
        %v478 = vadd.f32 %v476, %v477
        %v479 = vsel %vm245, %v234, 0.0
        %v480 = vadd.f32 %v478, %v479
        %v481 = vsel %vm245, %v235, 0.0
        %v482 = vadd.f32 %v480, %v481
        %v483 = vsel %vm245, %v236, 0.0
        %v484 = vadd.f32 %v482, %v483
        %v485 = vsel %vm245, %v237, 0.0
        %v486 = vadd.f32 %v484, %v485
        %v487 = vsel %vm245, %v238, 0.0
        %v488 = vadd.f32 %v486, %v487
        %v489 = vsel %vm245, %v239, 0.0
        %v490 = vadd.f32 %v488, %v489
        %v491 = vsel %vm245, %v240, 0.0
        %v492 = vadd.f32 %v490, %v491
        %v493 = vsel %vm245, %v241, 0.0
        %v494 = vadd.f32 %v492, %v493
        %v495 = vsel %vm245, %v242, 0.0
        %v496 = vadd.f32 %v494, %v495
        %v497 = vsel %vm245, %v243, 0.0
        %v498 = vadd.f32 %v496, %v497
        %v499 = vsel %vm245, %v244, 0.0
        %v500 = vadd.f32 %v498, %v499
        %v501 = vrot.slane %v500, 4
        %v502 = vadd.f32 %v500, %v501
        %v503 = vrot.slane %v502, 2
        %v504 = vadd.f32 %v502, %v503
        %v505 = vrot.slane %v504, 1
        %v506 = vadd.f32 %v504, %v505
        %vm507 = vcmask 24576
        %508 = vst.msk [vmem:[%s110] sm:$0x1] %vm507, %v506
        %v509 = vmul.f32 %v117, %v117
        %v510 = vmul.f32 %v118, %v118
        %v511 = vmul.f32 %v119, %v119
        %v512 = vmul.f32 %v120, %v120
        %v513 = vmul.f32 %v121, %v121
        %v514 = vmul.f32 %v122, %v122
        %v515 = vmul.f32 %v123, %v123
        %v516 = vmul.f32 %v124, %v124
        %v517 = vmul.f32 %v125, %v125
        %v518 = vmul.f32 %v126, %v126
        %v519 = vmul.f32 %v127, %v127
        %v520 = vmul.f32 %v128, %v128
        %v521 = vmul.f32 %v129, %v129
        %v522 = vmul.f32 %v130, %v130
        %v523 = vmul.f32 %v131, %v131
        %v524 = vmul.f32 %v132, %v132
        %v525 = vmul.f32 %v133, %v133
        %v526 = vmul.f32 %v134, %v134
        %v527 = vmul.f32 %v135, %v135
        %v528 = vmul.f32 %v136, %v136
        %v529 = vmul.f32 %v137, %v137
        %v530 = vmul.f32 %v138, %v138
        %v531 = vmul.f32 %v139, %v139
        %v532 = vmul.f32 %v140, %v140
        %v533 = vmul.f32 %v141, %v141
        %v534 = vmul.f32 %v142, %v142
        %v535 = vmul.f32 %v143, %v143
        %v536 = vmul.f32 %v144, %v144
        %v537 = vmul.f32 %v145, %v145
        %v538 = vmul.f32 %v146, %v146
        %v539 = vmul.f32 %v147, %v147
        %v540 = vmul.f32 %v148, %v148
        %v541 = vmul.f32 %v149, %v149
        %v542 = vmul.f32 %v150, %v150
        %v543 = vmul.f32 %v151, %v151
        %v544 = vmul.f32 %v152, %v152
        %v545 = vmul.f32 %v153, %v153
        %v546 = vmul.f32 %v154, %v154
        %v547 = vmul.f32 %v155, %v155
        %v548 = vmul.f32 %v156, %v156
        %v549 = vmul.f32 %v157, %v157
        %v550 = vmul.f32 %v158, %v158
        %v551 = vmul.f32 %v159, %v159
        %v552 = vmul.f32 %v160, %v160
        %v553 = vmul.f32 %v161, %v161
        %v554 = vmul.f32 %v162, %v162
        %v555 = vmul.f32 %v163, %v163
        %v556 = vmul.f32 %v164, %v164
        %v557 = vmul.f32 %v165, %v165
        %v558 = vmul.f32 %v166, %v166
        %v559 = vmul.f32 %v167, %v167
        %v560 = vmul.f32 %v168, %v168
        %v561 = vmul.f32 %v169, %v169
        %v562 = vmul.f32 %v170, %v170
        %v563 = vmul.f32 %v171, %v171
        %v564 = vmul.f32 %v172, %v172
        %v565 = vmul.f32 %v173, %v173
        %v566 = vmul.f32 %v174, %v174
        %v567 = vmul.f32 %v175, %v175
        %v568 = vmul.f32 %v176, %v176
        %v569 = vmul.f32 %v177, %v177
        %v570 = vmul.f32 %v178, %v178
        %v571 = vmul.f32 %v179, %v179
        %v572 = vmul.f32 %v180, %v180
        %v573 = vmul.f32 %v181, %v181
        %v574 = vmul.f32 %v182, %v182
        %v575 = vmul.f32 %v183, %v183
        %v576 = vmul.f32 %v184, %v184
        %v577 = vmul.f32 %v185, %v185
        %v578 = vmul.f32 %v186, %v186
        %v579 = vmul.f32 %v187, %v187
        %v580 = vmul.f32 %v188, %v188
        %v581 = vmul.f32 %v189, %v189
        %v582 = vmul.f32 %v190, %v190
        %v583 = vmul.f32 %v191, %v191
        %v584 = vmul.f32 %v192, %v192
        %v585 = vmul.f32 %v193, %v193
        %v586 = vmul.f32 %v194, %v194
        %v587 = vmul.f32 %v195, %v195
        %v588 = vmul.f32 %v196, %v196
        %v589 = vmul.f32 %v197, %v197
        %v590 = vmul.f32 %v198, %v198
        %v591 = vmul.f32 %v199, %v199
        %v592 = vmul.f32 %v200, %v200
        %v593 = vmul.f32 %v201, %v201
        %v594 = vmul.f32 %v202, %v202
        %v595 = vmul.f32 %v203, %v203
        %v596 = vmul.f32 %v204, %v204
        %v597 = vmul.f32 %v205, %v205
        %v598 = vmul.f32 %v206, %v206
        %v599 = vmul.f32 %v207, %v207
        %v600 = vmul.f32 %v208, %v208
        %v601 = vmul.f32 %v209, %v209
        %v602 = vmul.f32 %v210, %v210
        %v603 = vmul.f32 %v211, %v211
        %v604 = vmul.f32 %v212, %v212
        %v605 = vmul.f32 %v213, %v213
        %v606 = vmul.f32 %v214, %v214
        %v607 = vmul.f32 %v215, %v215
        %v608 = vmul.f32 %v216, %v216
        %v609 = vmul.f32 %v217, %v217
        %v610 = vmul.f32 %v218, %v218
        %v611 = vmul.f32 %v219, %v219
        %v612 = vmul.f32 %v220, %v220
        %v613 = vmul.f32 %v221, %v221
        %v614 = vmul.f32 %v222, %v222
        %v615 = vmul.f32 %v223, %v223
        %v616 = vmul.f32 %v224, %v224
        %v617 = vmul.f32 %v225, %v225
        %v618 = vmul.f32 %v226, %v226
        %v619 = vmul.f32 %v227, %v227
        %v620 = vmul.f32 %v228, %v228
        %v621 = vmul.f32 %v229, %v229
        %v622 = vmul.f32 %v230, %v230
        %v623 = vmul.f32 %v231, %v231
        %v624 = vmul.f32 %v232, %v232
        %v625 = vmul.f32 %v233, %v233
        %v626 = vmul.f32 %v234, %v234
        %v627 = vmul.f32 %v235, %v235
        %v628 = vmul.f32 %v236, %v236
        %v629 = vmul.f32 %v237, %v237
        %v630 = vmul.f32 %v238, %v238
        %v631 = vmul.f32 %v239, %v239
        %v632 = vmul.f32 %v240, %v240
        %v633 = vmul.f32 %v241, %v241
        %v634 = vmul.f32 %v242, %v242
        %v635 = vmul.f32 %v243, %v243
        %v636 = vmul.f32 %v244, %v244
        %v637 = vsel %vm245, %v509, 0.0
        %v638 = vsel %vm245, %v510, 0.0
        %v639 = vadd.f32 %v637, %v638
        %v640 = vsel %vm245, %v511, 0.0
        %v641 = vadd.f32 %v639, %v640
        %v642 = vsel %vm245, %v512, 0.0
        %v643 = vadd.f32 %v641, %v642
        %v644 = vsel %vm245, %v513, 0.0
        %v645 = vadd.f32 %v643, %v644
        %v646 = vsel %vm245, %v514, 0.0
        %v647 = vadd.f32 %v645, %v646
        %v648 = vsel %vm245, %v515, 0.0
        %v649 = vadd.f32 %v647, %v648
        %v650 = vsel %vm245, %v516, 0.0
        %v651 = vadd.f32 %v649, %v650
        %v652 = vsel %vm245, %v517, 0.0
        %v653 = vadd.f32 %v651, %v652
        %v654 = vsel %vm245, %v518, 0.0
        %v655 = vadd.f32 %v653, %v654
        %v656 = vsel %vm245, %v519, 0.0
        %v657 = vadd.f32 %v655, %v656
        %v658 = vsel %vm245, %v520, 0.0
        %v659 = vadd.f32 %v657, %v658
        %v660 = vsel %vm245, %v521, 0.0
        %v661 = vadd.f32 %v659, %v660
        %v662 = vsel %vm245, %v522, 0.0
        %v663 = vadd.f32 %v661, %v662
        %v664 = vsel %vm245, %v523, 0.0
        %v665 = vadd.f32 %v663, %v664
        %v666 = vsel %vm245, %v524, 0.0
        %v667 = vadd.f32 %v665, %v666
        %v668 = vsel %vm245, %v525, 0.0
        %v669 = vadd.f32 %v667, %v668
        %v670 = vsel %vm245, %v526, 0.0
        %v671 = vadd.f32 %v669, %v670
        %v672 = vsel %vm245, %v527, 0.0
        %v673 = vadd.f32 %v671, %v672
        %v674 = vsel %vm245, %v528, 0.0
        %v675 = vadd.f32 %v673, %v674
        %v676 = vsel %vm245, %v529, 0.0
        %v677 = vadd.f32 %v675, %v676
        %v678 = vsel %vm245, %v530, 0.0
        %v679 = vadd.f32 %v677, %v678
        %v680 = vsel %vm245, %v531, 0.0
        %v681 = vadd.f32 %v679, %v680
        %v682 = vsel %vm245, %v532, 0.0
        %v683 = vadd.f32 %v681, %v682
        %v684 = vsel %vm245, %v533, 0.0
        %v685 = vadd.f32 %v683, %v684
        %v686 = vsel %vm245, %v534, 0.0
        %v687 = vadd.f32 %v685, %v686
        %v688 = vsel %vm245, %v535, 0.0
        %v689 = vadd.f32 %v687, %v688
        %v690 = vsel %vm245, %v536, 0.0
        %v691 = vadd.f32 %v689, %v690
        %v692 = vsel %vm245, %v537, 0.0
        %v693 = vadd.f32 %v691, %v692
        %v694 = vsel %vm245, %v538, 0.0
        %v695 = vadd.f32 %v693, %v694
        %v696 = vsel %vm245, %v539, 0.0
        %v697 = vadd.f32 %v695, %v696
        %v698 = vsel %vm245, %v540, 0.0
        %v699 = vadd.f32 %v697, %v698
        %v700 = vsel %vm245, %v541, 0.0
        %v701 = vadd.f32 %v699, %v700
        %v702 = vsel %vm245, %v542, 0.0
        %v703 = vadd.f32 %v701, %v702
        %v704 = vsel %vm245, %v543, 0.0
        %v705 = vadd.f32 %v703, %v704
        %v706 = vsel %vm245, %v544, 0.0
        %v707 = vadd.f32 %v705, %v706
        %v708 = vsel %vm245, %v545, 0.0
        %v709 = vadd.f32 %v707, %v708
        %v710 = vsel %vm245, %v546, 0.0
        %v711 = vadd.f32 %v709, %v710
        %v712 = vsel %vm245, %v547, 0.0
        %v713 = vadd.f32 %v711, %v712
        %v714 = vsel %vm245, %v548, 0.0
        %v715 = vadd.f32 %v713, %v714
        %v716 = vsel %vm245, %v549, 0.0
        %v717 = vadd.f32 %v715, %v716
        %v718 = vsel %vm245, %v550, 0.0
        %v719 = vadd.f32 %v717, %v718
        %v720 = vsel %vm245, %v551, 0.0
        %v721 = vadd.f32 %v719, %v720
        %v722 = vsel %vm245, %v552, 0.0
        %v723 = vadd.f32 %v721, %v722
        %v724 = vsel %vm245, %v553, 0.0
        %v725 = vadd.f32 %v723, %v724
        %v726 = vsel %vm245, %v554, 0.0
        %v727 = vadd.f32 %v725, %v726
        %v728 = vsel %vm245, %v555, 0.0
        %v729 = vadd.f32 %v727, %v728
        %v730 = vsel %vm245, %v556, 0.0
        %v731 = vadd.f32 %v729, %v730
        %v732 = vsel %vm245, %v557, 0.0
        %v733 = vadd.f32 %v731, %v732
        %v734 = vsel %vm245, %v558, 0.0
        %v735 = vadd.f32 %v733, %v734
        %v736 = vsel %vm245, %v559, 0.0
        %v737 = vadd.f32 %v735, %v736
        %v738 = vsel %vm245, %v560, 0.0
        %v739 = vadd.f32 %v737, %v738
        %v740 = vsel %vm245, %v561, 0.0
        %v741 = vadd.f32 %v739, %v740
        %v742 = vsel %vm245, %v562, 0.0
        %v743 = vadd.f32 %v741, %v742
        %v744 = vsel %vm245, %v563, 0.0
        %v745 = vadd.f32 %v743, %v744
        %v746 = vsel %vm245, %v564, 0.0
        %v747 = vadd.f32 %v745, %v746
        %v748 = vsel %vm245, %v565, 0.0
        %v749 = vadd.f32 %v747, %v748
        %v750 = vsel %vm245, %v566, 0.0
        %v751 = vadd.f32 %v749, %v750
        %v752 = vsel %vm245, %v567, 0.0
        %v753 = vadd.f32 %v751, %v752
        %v754 = vsel %vm245, %v568, 0.0
        %v755 = vadd.f32 %v753, %v754
        %v756 = vsel %vm245, %v569, 0.0
        %v757 = vadd.f32 %v755, %v756
        %v758 = vsel %vm245, %v570, 0.0
        %v759 = vadd.f32 %v757, %v758
        %v760 = vsel %vm245, %v571, 0.0
        %v761 = vadd.f32 %v759, %v760
        %v762 = vsel %vm245, %v572, 0.0
        %v763 = vadd.f32 %v761, %v762
        %v764 = vsel %vm245, %v573, 0.0
        %v765 = vadd.f32 %v763, %v764
        %v766 = vsel %vm245, %v574, 0.0
        %v767 = vadd.f32 %v765, %v766
        %v768 = vsel %vm245, %v575, 0.0
        %v769 = vadd.f32 %v767, %v768
        %v770 = vsel %vm245, %v576, 0.0
        %v771 = vadd.f32 %v769, %v770
        %v772 = vsel %vm245, %v577, 0.0
        %v773 = vadd.f32 %v771, %v772
        %v774 = vsel %vm245, %v578, 0.0
        %v775 = vadd.f32 %v773, %v774
        %v776 = vsel %vm245, %v579, 0.0
        %v777 = vadd.f32 %v775, %v776
        %v778 = vsel %vm245, %v580, 0.0
        %v779 = vadd.f32 %v777, %v778
        %v780 = vsel %vm245, %v581, 0.0
        %v781 = vadd.f32 %v779, %v780
        %v782 = vsel %vm245, %v582, 0.0
        %v783 = vadd.f32 %v781, %v782
        %v784 = vsel %vm245, %v583, 0.0
        %v785 = vadd.f32 %v783, %v784
        %v786 = vsel %vm245, %v584, 0.0
        %v787 = vadd.f32 %v785, %v786
        %v788 = vsel %vm245, %v585, 0.0
        %v789 = vadd.f32 %v787, %v788
        %v790 = vsel %vm245, %v586, 0.0
        %v791 = vadd.f32 %v789, %v790
        %v792 = vsel %vm245, %v587, 0.0
        %v793 = vadd.f32 %v791, %v792
        %v794 = vsel %vm245, %v588, 0.0
        %v795 = vadd.f32 %v793, %v794
        %v796 = vsel %vm245, %v589, 0.0
        %v797 = vadd.f32 %v795, %v796
        %v798 = vsel %vm245, %v590, 0.0
        %v799 = vadd.f32 %v797, %v798
        %v800 = vsel %vm245, %v591, 0.0
        %v801 = vadd.f32 %v799, %v800
        %v802 = vsel %vm245, %v592, 0.0
        %v803 = vadd.f32 %v801, %v802
        %v804 = vsel %vm245, %v593, 0.0
        %v805 = vadd.f32 %v803, %v804
        %v806 = vsel %vm245, %v594, 0.0
        %v807 = vadd.f32 %v805, %v806
        %v808 = vsel %vm245, %v595, 0.0
        %v809 = vadd.f32 %v807, %v808
        %v810 = vsel %vm245, %v596, 0.0
        %v811 = vadd.f32 %v809, %v810
        %v812 = vsel %vm245, %v597, 0.0
        %v813 = vadd.f32 %v811, %v812
        %v814 = vsel %vm245, %v598, 0.0
        %v815 = vadd.f32 %v813, %v814
        %v816 = vsel %vm245, %v599, 0.0
        %v817 = vadd.f32 %v815, %v816
        %v818 = vsel %vm245, %v600, 0.0
        %v819 = vadd.f32 %v817, %v818
        %v820 = vsel %vm245, %v601, 0.0
        %v821 = vadd.f32 %v819, %v820
        %v822 = vsel %vm245, %v602, 0.0
        %v823 = vadd.f32 %v821, %v822
        %v824 = vsel %vm245, %v603, 0.0
        %v825 = vadd.f32 %v823, %v824
        %v826 = vsel %vm245, %v604, 0.0
        %v827 = vadd.f32 %v825, %v826
        %v828 = vsel %vm245, %v605, 0.0
        %v829 = vadd.f32 %v827, %v828
        %v830 = vsel %vm245, %v606, 0.0
        %v831 = vadd.f32 %v829, %v830
        %v832 = vsel %vm245, %v607, 0.0
        %v833 = vadd.f32 %v831, %v832
        %v834 = vsel %vm245, %v608, 0.0
        %v835 = vadd.f32 %v833, %v834
        %v836 = vsel %vm245, %v609, 0.0
        %v837 = vadd.f32 %v835, %v836
        %v838 = vsel %vm245, %v610, 0.0
        %v839 = vadd.f32 %v837, %v838
        %v840 = vsel %vm245, %v611, 0.0
        %v841 = vadd.f32 %v839, %v840
        %v842 = vsel %vm245, %v612, 0.0
        %v843 = vadd.f32 %v841, %v842
        %v844 = vsel %vm245, %v613, 0.0
        %v845 = vadd.f32 %v843, %v844
        %v846 = vsel %vm245, %v614, 0.0
        %v847 = vadd.f32 %v845, %v846
        %v848 = vsel %vm245, %v615, 0.0
        %v849 = vadd.f32 %v847, %v848
        %v850 = vsel %vm245, %v616, 0.0
        %v851 = vadd.f32 %v849, %v850
        %v852 = vsel %vm245, %v617, 0.0
        %v853 = vadd.f32 %v851, %v852
        %v854 = vsel %vm245, %v618, 0.0
        %v855 = vadd.f32 %v853, %v854
        %v856 = vsel %vm245, %v619, 0.0
        %v857 = vadd.f32 %v855, %v856
        %v858 = vsel %vm245, %v620, 0.0
        %v859 = vadd.f32 %v857, %v858
        %v860 = vsel %vm245, %v621, 0.0
        %v861 = vadd.f32 %v859, %v860
        %v862 = vsel %vm245, %v622, 0.0
        %v863 = vadd.f32 %v861, %v862
        %v864 = vsel %vm245, %v623, 0.0
        %v865 = vadd.f32 %v863, %v864
        %v866 = vsel %vm245, %v624, 0.0
        %v867 = vadd.f32 %v865, %v866
        %v868 = vsel %vm245, %v625, 0.0
        %v869 = vadd.f32 %v867, %v868
        %v870 = vsel %vm245, %v626, 0.0
        %v871 = vadd.f32 %v869, %v870
        %v872 = vsel %vm245, %v627, 0.0
        %v873 = vadd.f32 %v871, %v872
        %v874 = vsel %vm245, %v628, 0.0
        %v875 = vadd.f32 %v873, %v874
        %v876 = vsel %vm245, %v629, 0.0
        %v877 = vadd.f32 %v875, %v876
        %v878 = vsel %vm245, %v630, 0.0
        %v879 = vadd.f32 %v877, %v878
        %v880 = vsel %vm245, %v631, 0.0
        %v881 = vadd.f32 %v879, %v880
        %v882 = vsel %vm245, %v632, 0.0
        %v883 = vadd.f32 %v881, %v882
        %v884 = vsel %vm245, %v633, 0.0
        %v885 = vadd.f32 %v883, %v884
        %v886 = vsel %vm245, %v634, 0.0
        %v887 = vadd.f32 %v885, %v886
        %v888 = vsel %vm245, %v635, 0.0
        %v889 = vadd.f32 %v887, %v888
        %v890 = vsel %vm245, %v636, 0.0
        %v891 = vadd.f32 %v889, %v890
        %v892 = vrot.slane %v891, 4
        %v893 = vadd.f32 %v891, %v892
        %v894 = vrot.slane %v893, 2
        %v895 = vadd.f32 %v893, %v894
        %v896 = vrot.slane %v895, 1
        %v897 = vadd.f32 %v895, %v896
        %898 = vst.msk [vmem:[%s110 + $0x1] sm:$0x1] %vm507, %v897
        %s899 = sand.u32 %s49, 1
        %s900 = scalar_lea.sflag [#allocation3], %s899
        %s901 = sand.u32 %s49, 1
        %s902 = smul.addr %s901, 2
        %s903 = scalar_lea.vmem [#allocation2], %s902
        // Predicated region
        $region25: #{tpu_custom_call.1} parent=23 // pred_check
          %p904 = pneg %p59
        $region26: #{tpu_custom_call.1} parent=23 // pred_check_branch
          %906 = sbr.rel (%p904) target = $region28
        $region27: #{tpu_custom_call.1} parent=23 // pred_region
          %s908 = ssub.s32 32, 32
          %909 = vsyncadd %s900, %s908
          %s910 = smul.addr %s15, 32
          %s911 = scalar_lea.hbm %s1, %s910
          %s913 = sshll.u32 %s903, 4
          %s914 = int_to_ptr.vmem [resolvable:$true] %s913
          %916 = dma.vmem_to_hbm [thread:$0]  %s914, 32, %s911, %s900
        $region28: #{tpu_custom_call.1} parent=23 // pred_fallthru
          _
      $region24: #{tpu_custom_call.1} parent=5 // pred_fallthru
        _
      %p917 = scmp.le.s32.totalorder 2, %s10
      // Predicated region
      $region29: #{tpu_custom_call.1} parent=5 // pred_check
        %p918 = pneg %p917
      $region30: #{tpu_custom_call.1} parent=5 // pred_check_branch
        %920 = sbr.rel (%p918) target = $region32
      $region31: #{tpu_custom_call.1} parent=5 // pred_region
        %s921 = ssub.s32 %s10, 2
        // Predicated region
        $region33: #{tpu_custom_call.1} parent=31 // pred_check
          %p922 = pneg %p65
        $region34: #{tpu_custom_call.1} parent=31 // pred_check_branch
          %924 = sbr.rel (%p922) target = $region36
        $region35: #{tpu_custom_call.1} parent=31 // pred_region
          %s925 = sand.u32 %s50, 1
          %s926 = scalar_lea.sflag [#allocation3], %s925
          %s927 = sand.u32 %s50, 1
          %s928 = smul.addr %s927, 2
          %s929 = scalar_lea.vmem [#allocation2], %s928
          %930 = dma.done %s926, 32
        $region36: #{tpu_custom_call.1} parent=31 // pred_fallthru
          _
      $region32: #{tpu_custom_call.1} parent=5 // pred_fallthru
        _
    $region6: #{tpu_custom_call.1} parent=1 // loop_footer
      %s14 = sadd.s32 1, %s10
    $region7: #{tpu_custom_call.1} parent=1 // loop_footer_branch
      %9 = sbr.rel target = $region3
    $region8: #{tpu_custom_call.1} parent=1 // loop_exit
      _
    %931 = vsyncpa [#allocation3], 1
    %s932 = scalar_lea.sflag [#allocation3], 1
    %933 = vsyncpa %s932, 1

</llo_original>
